<compile_context>
chip_gen: v5e
topology: v5e:2x2
jax: 0.10.0
libtpu: 0.0.40
codegen_flags: <defaults>
</compile_context>

<pallas_src>
import jax
import jax.numpy as jnp
from jax.experimental import pallas as pl
from jax.experimental.pallas import tpu as pltpu

EPS = 1e-12  # F.normalize default eps


def _round_up(x, m):
    return ((x + m - 1) // m) * m


def _mlp_kernel(x_ref, w1_ref, b1_ref, w2_ref, b2_ref, o_ref):
    # x_ref : (TM, D)   one tile of flattened rows
    # w1_ref: (D, D), b1_ref: (1, D)
    # w2_ref: (D, P), b2_ref: (1, P)
    # o_ref : (TM, P)
    x = x_ref[...].astype(jnp.float32)

    # Linear1 + ReLU
    h = jnp.dot(x, w1_ref[...], preferred_element_type=jnp.float32)
    h = jnp.maximum(h + b1_ref[...], 0.0)

    # Linear2
    y = jnp.dot(h, w2_ref[...], preferred_element_type=jnp.float32)
    y = y + b2_ref[...]                                   # (TM, P)

    # L2-normalize over the last (lane) axis.
    # max(||y||, eps) == sqrt(max(sum(y^2), eps^2))  ->  rsqrt on the EUP.
    sumsq = jnp.sum(y * y, axis=-1, keepdims=True)        # (TM, 1)
    inv = jax.lax.rsqrt(jnp.maximum(sumsq, EPS * EPS))
    o_ref[...] = (y * inv).astype(o_ref.dtype)


def mlp_forward(x, w1, b1, w2, b2, *, row_tile=512):
    """x: (..., dim_in) float32. Returns (..., proj_dim) float32, L2-normalized
    over the last dim. w1:(D,D) b1:(D,) w2:(D,P) b2:(P,)."""
    *lead, D = x.shape
    P = w2.shape[1]

    M = 1
    for d in lead:
        M *= d
    x2 = x.reshape(M, D)

    # Row tile: as large as practical, multiple of 8 (sublane), padded batch.
    TM = min(row_tile, _round_up(M, 8))
    M_pad = _round_up(M, TM)
    if M_pad != M:
        # Zero rows normalize to zero (sumsq=0 -> y*rsqrt(eps^2)=0); sliced off below.
        x2 = jnp.pad(x2, ((0, M_pad - M), (0, 0)))

    b1_2d = b1.reshape(1, D)
    b2_2d = b2.reshape(1, P)

    out = pl.pallas_call(
        _mlp_kernel,
        out_shape=jax.ShapeDtypeStruct((M_pad, P), jnp.float32),
        grid_spec=pltpu.PrefetchScalarGridSpec(
            num_scalar_prefetch=0,
            grid=(M_pad // TM,),
            in_specs=[
                pl.BlockSpec((TM, D), lambda i: (i, 0)),
                pl.BlockSpec((D, D), lambda i: (0, 0)),
                pl.BlockSpec((1, D), lambda i: (0, 0)),
                pl.BlockSpec((D, P), lambda i: (0, 0)),
                pl.BlockSpec((1, P), lambda i: (0, 0)),
            ],
            out_specs=pl.BlockSpec((TM, P), lambda i: (i, 0)),
        ),
        compiler_params=pltpu.CompilerParams(
            # Row-tile axis is independent -> shards across v7x's 2 TCs.
            dimension_semantics=("parallel",),
        ),
    )(x2, w1, b1_2d, w2, b2_2d)

    out = out[:M]
    return out.reshape(*lead, P)


def _reference(x, w1, b1, w2, b2):
    """Pure-JAX reference mirroring the PyTorch MLP module."""
    h = jnp.maximum(x @ w1 + b1, 0.0)
    y = h @ w2 + b2
    norm = jnp.sqrt(jnp.sum(y * y, axis=-1, keepdims=True))
    return y / jnp.maximum(norm, EPS)


if __name__ == "__main__":
    key = jax.random.PRNGKey(0)
    B, S, D = 2, 8, 32        # batch, seq, dim_in
    P = 256                   # proj_dim (module default)

    kx, k1, kb1, k2, kb2 = jax.random.split(key, 5)
    x = jax.random.normal(kx, (B, S, D), dtype=jnp.float32)

    # Parameters stored as (in, out) so the kernel matmuls directly
    # (equivalent to nn.Linear weight transposed).
    w1 = jax.random.normal(k1, (D, D), dtype=jnp.float32) * (1.0 / jnp.sqrt(D))
    b1 = jax.random.normal(kb1, (D,), dtype=jnp.float32) * 0.1
    w2 = jax.random.normal(k2, (D, P), dtype=jnp.float32) * (1.0 / jnp.sqrt(D))
    b2 = jax.random.normal(kb2, (P,), dtype=jnp.float32) * 0.1

    out = jax.block_until_ready(mlp_forward(x, w1, b1, w2, b2))
    ref = jax.block_until_ready(_reference(x, w1, b1, w2, b2))

    assert out.shape == (B, S, P)
    assert jnp.allclose(out, ref, atol=1e-5, rtol=1e-5)

    print("KERNEL_OK")
</pallas_src>

<mosaic_0001>
module attributes {stable_mosaic.version = 11 : i64} {
  func.func @_mlp_kernel(%arg0: i32, %arg1: memref<16x32xf32, #tpu.memory_space<vmem>>, %arg2: memref<32x32xf32, #tpu.memory_space<vmem>>, %arg3: memref<1x32xf32, #tpu.memory_space<vmem>>, %arg4: memref<32x256xf32, #tpu.memory_space<vmem>>, %arg5: memref<1x256xf32, #tpu.memory_space<vmem>>, %arg6: memref<16x256xf32, #tpu.memory_space<vmem>>) attributes {dimension_semantics = [#tpu.dimension_semantics<parallel>], iteration_bounds = array<i64: 1>, scalar_prefetch = 0 : i64, scratch_operands = 0 : i64, tpu.core_type = #tpu.core_type<tc>, window_params = [{transform_indices = @transform_0, window_bounds = array<i64: 16, 32>}, {pipeline_mode = #tpu.pipeline_mode<synchronous>, transform_indices = @transform_1, window_bounds = array<i64: 32, 32>}, {pipeline_mode = #tpu.pipeline_mode<synchronous>, transform_indices = @transform_2, window_bounds = array<i64: 1, 32>}, {pipeline_mode = #tpu.pipeline_mode<synchronous>, transform_indices = @transform_3, window_bounds = array<i64: 32, 256>}, {pipeline_mode = #tpu.pipeline_mode<synchronous>, transform_indices = @transform_4, window_bounds = array<i64: 1, 256>}, {transform_indices = @transform_5, window_bounds = array<i64: 16, 256>}]} {
    %c0 = arith.constant 0 : index
    %c0_0 = arith.constant 0 : index
    %0 = vector.load %arg1[%c0, %c0_0] : memref<16x32xf32, #tpu.memory_space<vmem>>, vector<16x32xf32>
    %c0_1 = arith.constant 0 : index
    %c0_2 = arith.constant 0 : index
    %1 = vector.load %arg2[%c0_1, %c0_2] : memref<32x32xf32, #tpu.memory_space<vmem>>, vector<32x32xf32>
    %cst = arith.constant dense<0.000000e+00> : vector<16x32xf32>
    %2 = tpu.matmul %0, %1, %cst {dimension_numbers = #tpu.dot_dimension_numbers<[1], [0], [0], [1], [0, 0, 1, 1], [], []>} : vector<16x32xf32>, vector<32x32xf32>, vector<16x32xf32> -> vector<16x32xf32>
    %c0_3 = arith.constant 0 : index
    %c0_4 = arith.constant 0 : index
    %3 = vector.load %arg3[%c0_3, %c0_4] : memref<1x32xf32, #tpu.memory_space<vmem>>, vector<1x32xf32>
    %4 = vector.broadcast %3 : vector<1x32xf32> to vector<16x32xf32>
    %5 = arith.addf %2, %4 : vector<16x32xf32>
    %cst_5 = arith.constant 0.000000e+00 : f32
    %6 = vector.broadcast %cst_5 : f32 to vector<16x32xf32>
    %7 = arith.maximumf %5, %6 : vector<16x32xf32>
    %c0_6 = arith.constant 0 : index
    %c0_7 = arith.constant 0 : index
    %8 = vector.load %arg4[%c0_6, %c0_7] : memref<32x256xf32, #tpu.memory_space<vmem>>, vector<32x256xf32>
    %cst_8 = arith.constant dense<0.000000e+00> : vector<16x256xf32>
    %9 = tpu.matmul %7, %8, %cst_8 {dimension_numbers = #tpu.dot_dimension_numbers<[1], [0], [0], [1], [0, 0, 1, 1], [], []>} : vector<16x32xf32>, vector<32x256xf32>, vector<16x256xf32> -> vector<16x256xf32>
    %c0_9 = arith.constant 0 : index
    %c0_10 = arith.constant 0 : index
    %10 = vector.load %arg5[%c0_9, %c0_10] : memref<1x256xf32, #tpu.memory_space<vmem>>, vector<1x256xf32>
    %11 = vector.broadcast %10 : vector<1x256xf32> to vector<16x256xf32>
    %12 = arith.addf %9, %11 : vector<16x256xf32>
    %13 = arith.mulf %12, %12 : vector<16x256xf32>
    %cst_11 = arith.constant dense<0.000000e+00> : vector<16xf32>
    %14 = vector.multi_reduction <add>, %13, %cst_11 [1] : vector<16x256xf32> to vector<16xf32>
    %15 = vector.shape_cast %14 : vector<16xf32> to vector<16x1xf32>
    %cst_12 = arith.constant 1.000000e-24 : f32
    %16 = vector.broadcast %cst_12 : f32 to vector<16x1xf32>
    %17 = arith.maximumf %15, %16 : vector<16x1xf32>
    %18 = math.rsqrt %17 : vector<16x1xf32>
    %19 = vector.broadcast %18 : vector<16x1xf32> to vector<16x256xf32>
    %20 = arith.mulf %12, %19 : vector<16x256xf32>
    %c0_13 = arith.constant 0 : index
    %c0_14 = arith.constant 0 : index
    %21 = vector.load %arg6[%c0_13, %c0_14] : memref<16x256xf32, #tpu.memory_space<vmem>>, vector<16x256xf32>
    tpu.vector_store %arg6[%c0_13, %c0_14], %20 {strides = array<i32>} : memref<16x256xf32, #tpu.memory_space<vmem>>, vector<16x256xf32>,
    return
  }
  func.func @transform_0(%arg0: i32) -> (i32, i32) {
    %c0_i32 = arith.constant 0 : i32
    %c0_i32_0 = arith.constant 0 : i32
    return %arg0, %c0_i32 : i32, i32
  }
  func.func @transform_1(%arg0: i32) -> (i32, i32) {
    %c0_i32 = arith.constant 0 : i32
    %c0_i32_0 = arith.constant 0 : i32
    %c0_i32_1 = arith.constant 0 : i32
    return %c0_i32, %c0_i32_0 : i32, i32
  }
  func.func @transform_2(%arg0: i32) -> (i32, i32) {
    %c0_i32 = arith.constant 0 : i32
    %c0_i32_0 = arith.constant 0 : i32
    %c0_i32_1 = arith.constant 0 : i32
    return %c0_i32, %c0_i32_0 : i32, i32
  }
  func.func @transform_3(%arg0: i32) -> (i32, i32) {
    %c0_i32 = arith.constant 0 : i32
    %c0_i32_0 = arith.constant 0 : i32
    %c0_i32_1 = arith.constant 0 : i32
    return %c0_i32, %c0_i32_0 : i32, i32
  }
  func.func @transform_4(%arg0: i32) -> (i32, i32) {
    %c0_i32 = arith.constant 0 : i32
    %c0_i32_0 = arith.constant 0 : i32
    %c0_i32_1 = arith.constant 0 : i32
    return %c0_i32, %c0_i32_0 : i32, i32
  }
  func.func @transform_5(%arg0: i32) -> (i32, i32) {
    %c0_i32 = arith.constant 0 : i32
    %c0_i32_0 = arith.constant 0 : i32
    return %arg0, %c0_i32 : i32, i32
  }
}

</mosaic_0001>

<llo_original>
// kernel: tpu_custom_call.1
$region0: #{tpu_custom_call.1}
  #allocation0 [shape = 'u32[]', space=smem, size = 0x4, offset = 0x4, fixed_abs, tag = 'smem constant byte address 0x4 - core index']
  #allocation1 [shape = 'u32[72,128]{1,0:T(1,128)}', space=vmem, size = 0x9000, scoped, tag = 'internal scratch']
  %s0 = inlined_call_operand.hbm [shape: f32[16,32], index: 0, kind: input, shape index: {}]
  %s1 = inlined_call_operand.hbm [shape: f32[32,32], index: 1, kind: input, shape index: {}]
  %s2 = inlined_call_operand.vmem [shape: f32[1,32], index: 2, kind: input, shape index: {}]
  %s3 = inlined_call_operand.hbm [shape: f32[32,256], index: 3, kind: input, shape index: {}]
  %s4 = inlined_call_operand.vmem [shape: f32[1,256], index: 4, kind: input, shape index: {}]
  %s5 = inlined_call_operand.hbm [shape: f32[16,256], index: 5, kind: output, shape index: {}]
  %s6 = sld [smem:[#allocation0]]
  $region42: #{tpu_custom_call.1} parent=0
    _
  %s8 = ssub.s32 1, %s6
  %s9 = scalar_select 0, %s8, %s6
  $region1: #{tpu_custom_call.1} parent=0
    #allocation2 [shape = 'u8[8192]{0}', space=vmem, size = 0x2000, scoped, tag = 'input window, operand 0, single buffered']
    #allocation3 [shape = 's32[1]{0}', space=sflag, size = 0x4, scoped, tag = 'scoped memory for tpu_custom_call.1']
    #allocation4 [shape = 's32[1]{0}', space=sflag, size = 0x4, scoped, tag = 'scoped memory for tpu_custom_call.1']
    #allocation5 [shape = 'u8[16384]{0}', space=vmem, size = 0x4000, scoped, tag = 'input window, operand 1, single buffered']
    #allocation6 [shape = 's32[1]{0}', space=sflag, size = 0x4, scoped, tag = 'scoped memory for tpu_custom_call.1']
    #allocation7 [shape = 'u8[32768]{0}', space=vmem, size = 0x8000, scoped, tag = 'input window, operand 3, single buffered']
    #allocation8 [shape = 'u8[16384]{0}', space=vmem, size = 0x4000, scoped, tag = 'output window, operand 0, single buffered']
    %10 = vsyncpa [#allocation3], 0
    %11 = vsyncpa [#allocation6], 0
    %12 = vsyncpa [#allocation4], 0
    // Predicated region
    $region2: #{tpu_custom_call.1} parent=1 // pred_check
      _
    $region3: #{tpu_custom_call.1} parent=1 // pred_check_branch
      %14 = sbr.rel (0) target = $region5
    $region4: #{tpu_custom_call.1} parent=1 // pred_region
      %16 = vsyncadd [#allocation3], 0
      %s17 = sshll.u32 %s0, 4
      %s18 = int_to_ptr.hbm [resolvable:$true] %s17
      %s19 = sshll.u32 [#allocation2], 4
      %s20 = int_to_ptr.vmem [resolvable:$true] %s19
      %25 = dma.hbm_to_vmem [thread:$0]  %s18, 256, %s20, [#allocation3], 128, 128, 8
    $region5: #{tpu_custom_call.1} parent=1 // pred_fallthru
      _
    // Predicated region
    $region6: #{tpu_custom_call.1} parent=1 // pred_check
      _
    $region7: #{tpu_custom_call.1} parent=1 // pred_check_branch
      %27 = sbr.rel (0) target = $region9
    $region8: #{tpu_custom_call.1} parent=1 // pred_region
      %29 = vsyncadd [#allocation6], 0
      %s30 = sshll.u32 %s1, 4
      %s31 = int_to_ptr.hbm [resolvable:$true] %s30
      %s32 = sshll.u32 [#allocation5], 4
      %s33 = int_to_ptr.vmem [resolvable:$true] %s32
      %38 = dma.hbm_to_vmem [thread:$0]  %s31, 512, %s33, [#allocation6], 128, 128, 8
    $region9: #{tpu_custom_call.1} parent=1 // pred_fallthru
      _
    // Predicated region
    $region10: #{tpu_custom_call.1} parent=1 // pred_check
      _
    $region11: #{tpu_custom_call.1} parent=1 // pred_check_branch
      %40 = sbr.rel (0) target = $region13
    $region12: #{tpu_custom_call.1} parent=1 // pred_region
      _
    $region13: #{tpu_custom_call.1} parent=1 // pred_fallthru
      _
    // Predicated region
    $region14: #{tpu_custom_call.1} parent=1 // pred_check
      _
    $region15: #{tpu_custom_call.1} parent=1 // pred_check_branch
      %42 = sbr.rel (0) target = $region17
    $region16: #{tpu_custom_call.1} parent=1 // pred_region
      %44 = vsyncadd [#allocation6], 0
      %s45 = sshll.u32 %s3, 4
      %s46 = int_to_ptr.hbm [resolvable:$true] %s45
      %s47 = sshll.u32 [#allocation7], 4
      %s48 = int_to_ptr.vmem [resolvable:$true] %s47
      %53 = dma.hbm_to_vmem [thread:$0]  %s46, 1024, %s48, [#allocation6], 256, 256, 16
    $region17: #{tpu_custom_call.1} parent=1 // pred_fallthru
      _
    // Predicated region
    $region18: #{tpu_custom_call.1} parent=1 // pred_check
      _
    $region19: #{tpu_custom_call.1} parent=1 // pred_check_branch
      %55 = sbr.rel (0) target = $region21
    $region20: #{tpu_custom_call.1} parent=1 // pred_region
      _
    $region21: #{tpu_custom_call.1} parent=1 // pred_fallthru
      _
    // Predicated region
    $region22: #{tpu_custom_call.1} parent=1 // pred_check
      _
    $region23: #{tpu_custom_call.1} parent=1 // pred_check_branch
      %57 = sbr.rel (0) target = $region25
    $region24: #{tpu_custom_call.1} parent=1 // pred_region
      %59 = dma.done [#allocation3], 256
    $region25: #{tpu_custom_call.1} parent=1 // pred_fallthru
      _
    // Predicated region
    $region26: #{tpu_custom_call.1} parent=1 // pred_check
      _
    $region27: #{tpu_custom_call.1} parent=1 // pred_check_branch
      %61 = sbr.rel (0) target = $region29
    $region28: #{tpu_custom_call.1} parent=1 // pred_region
      %63 = dma.done [#allocation6], 512
    $region29: #{tpu_custom_call.1} parent=1 // pred_fallthru
      _
    // Predicated region
    $region30: #{tpu_custom_call.1} parent=1 // pred_check
      _
    $region31: #{tpu_custom_call.1} parent=1 // pred_check_branch
      %65 = sbr.rel (0) target = $region33
    $region32: #{tpu_custom_call.1} parent=1 // pred_region
      %67 = dma.done [#allocation6], 1024
    $region33: #{tpu_custom_call.1} parent=1 // pred_fallthru
      _
    %v68 = vld [vmem:[#allocation2] sm:$0xff]
    %v69 = vld [vmem:[#allocation2 + $0x8] sm:$0xff]
    %v70 = vld [vmem:[#allocation5] sm:$0xff]
    %v71 = vld [vmem:[#allocation5 + $0x8] sm:$0xff]
    %v72 = vld [vmem:[#allocation5 + $0x10] sm:$0xff]
    %v73 = vld [vmem:[#allocation5 + $0x18] sm:$0xff]
    %v74 = vld [vmem:[%s2] sm:$0x1]
    %v76 = vperm.slane %v74, 0
    %vm78 = vcmask 261120
    %v80 = vsel %vm78, %v68, 0
    %v83 = vsel %vm78, %v69, 0
    %85 = vmatpush.msra.mxu0 0.0
    %86 = vmatpush.msra.mxu0 0.0
    %87 = vmatpush.msra.mxu0 0.0
    %88 = vmatpush.msra.mxu0 0.0
    %89 = vmatpush.msra.mxu0 0.0
    %90 = vmatpush.msra.mxu0 0.0
    %91 = vmatpush.msra.mxu0 0.0
    %92 = vmatpush.msra.mxu0 0.0
    %93 = vmatpush.msra.mxu0 0.0
    %94 = vmatpush.msra.mxu0 0.0
    %95 = vmatpush.msra.mxu0 0.0
    %96 = vmatpush.msra.mxu0 0.0
    %97 = vmatpush.msra.mxu0 %v73
    %98 = vmatpush.msra.mxu0 %v72
    %99 = vmatpush.msra.mxu0 %v71
    %100 = vmatpush.msra.mxu0 %v70
    %101 = vmatmul.f32.gmra.mxu0 %v80
    %v102 = vpop.f32.mrf.mxu0
    %v103 = vadd.f32 %v76, %v102
    %104 = vmatmul.f32.gmra.mxu0 %v83
    %v105 = vpop.f32.mrf.mxu0
    %v106 = vadd.f32 %v76, %v105
    %107 = vdwg.mxu0
    %v108 = vmax.f32 %v103, 0.0
    %v109 = vmax.f32 %v106, 0.0
    %v110 = vld [vmem:[#allocation7] sm:$0xff]
    %v111 = vld [vmem:[#allocation7 + $0x8] sm:$0xff]
    %v112 = vld [vmem:[#allocation7 + $0x10] sm:$0xff]
    %v113 = vld [vmem:[#allocation7 + $0x18] sm:$0xff]
    %v114 = vld [vmem:[#allocation7 + $0x20] sm:$0xff]
    %v115 = vld [vmem:[#allocation7 + $0x28] sm:$0xff]
    %v116 = vld [vmem:[#allocation7 + $0x30] sm:$0xff]
    %v117 = vld [vmem:[#allocation7 + $0x38] sm:$0xff]
    %v118 = vld [vmem:[%s4] sm:$0x3]
    %v120 = vperm.slane %v118, 0
    %v121 = vperm.slane %v118, 1
    %v125 = vsel %vm78, %v108, 0
    %v128 = vsel %vm78, %v109, 0
    %130 = vmatpush.msra.mxu0 0.0
    %131 = vmatpush.msra.mxu0 0.0
    %132 = vmatpush.msra.mxu0 0.0
    %133 = vmatpush.msra.mxu0 0.0
    %134 = vmatpush.msra.mxu0 0.0
    %135 = vmatpush.msra.mxu0 0.0
    %136 = vmatpush.msra.mxu0 0.0
    %137 = vmatpush.msra.mxu0 0.0
    %138 = vmatpush.msra.mxu0 0.0
    %139 = vmatpush.msra.mxu0 0.0
    %140 = vmatpush.msra.mxu0 0.0
    %141 = vmatpush.msra.mxu0 0.0
    %142 = vmatpush.msra.mxu0 %v116
    %143 = vmatpush.msra.mxu0 %v114
    %144 = vmatpush.msra.mxu0 %v112
    %145 = vmatpush.msra.mxu0 %v110
    %146 = vmatmul.f32.gmra.mxu0 %v125
    %v147 = vpop.f32.mrf.mxu0
    %v148 = vadd.f32 %v120, %v147
    %149 = vmatmul.f32.gmra.mxu0 %v128
    %v150 = vpop.f32.mrf.mxu0
    %v151 = vadd.f32 %v120, %v150
    %152 = vdwg.mxu0
    %153 = vmatpush.msra.mxu0 0.0
    %154 = vmatpush.msra.mxu0 0.0
    %155 = vmatpush.msra.mxu0 0.0
    %156 = vmatpush.msra.mxu0 0.0
    %157 = vmatpush.msra.mxu0 0.0
    %158 = vmatpush.msra.mxu0 0.0
    %159 = vmatpush.msra.mxu0 0.0
    %160 = vmatpush.msra.mxu0 0.0
    %161 = vmatpush.msra.mxu0 0.0
    %162 = vmatpush.msra.mxu0 0.0
    %163 = vmatpush.msra.mxu0 0.0
    %164 = vmatpush.msra.mxu0 0.0
    %165 = vmatpush.msra.mxu0 %v117
    %166 = vmatpush.msra.mxu0 %v115
    %167 = vmatpush.msra.mxu0 %v113
    %168 = vmatpush.msra.mxu0 %v111
    %169 = vmatmul.f32.gmra.mxu0 %v125
    %v170 = vpop.f32.mrf.mxu0
    %v171 = vadd.f32 %v121, %v170
    %172 = vmatmul.f32.gmra.mxu0 %v128
    %v173 = vpop.f32.mrf.mxu0
    %v174 = vadd.f32 %v121, %v173
    %175 = vdwg.mxu0
    %v176 = vmul.f32 %v148, %v148
    %v177 = vmul.f32 %v171, %v171
    %v178 = vmul.f32 %v151, %v151
    %v179 = vmul.f32 %v174, %v174
    %v180 = vadd.f32 %v176, %v177
    %181 = vadd.xlane.f32.xlu0 %v180
    %v182 = vpop.xlane.xlu0 %181
    %v183 = vadd.f32 %v178, %v179
    %184 = vadd.xlane.f32.xlu0 %v183
    %v185 = vpop.xlane.xlu0 %184
    %v186 = vmax.f32 %v182, 1e-24
    %v187 = vmax.f32 %v185, 1e-24
    %v188 = vrsqrt.pop %v186
    %v189 = vmul.f32 %v188, %v186
    %v190 = vmul.f32 %v189, %v188
    %v191 = vmul.f32 0.5, %v190
    %v192 = vsub.f32 1.5, %v191
    %v193 = vmul.f32 %v188, %v192
    %vm194 = vweird.f32 %v186
    %vm195 = vweird.f32 %v188
    %vm196 = vmor %vm194, %vm195
    %v197 = vsel %vm196, %v188, %v193
    %v198 = vrsqrt.pop %v187
    %v199 = vmul.f32 %v198, %v187
    %v200 = vmul.f32 %v199, %v198
    %v201 = vmul.f32 0.5, %v200
    %v202 = vsub.f32 1.5, %v201
    %v203 = vmul.f32 %v198, %v202
    %vm204 = vweird.f32 %v187
    %vm205 = vweird.f32 %v198
    %vm206 = vmor %vm204, %vm205
    %v207 = vsel %vm206, %v198, %v203
    %v208 = vmul.f32 %v148, %v197
    %v209 = vmul.f32 %v171, %v197
    %v210 = vmul.f32 %v151, %v207
    %v211 = vmul.f32 %v174, %v207
    %212 = vst [vmem:[#allocation8] sm:$0xff] %v208
    %213 = vst [vmem:[#allocation8 + $0x8] sm:$0xff] %v209
    %214 = vst [vmem:[#allocation8 + $0x10] sm:$0xff] %v210
    %215 = vst [vmem:[#allocation8 + $0x18] sm:$0xff] %v211
    // Predicated region
    $region34: #{tpu_custom_call.1} parent=1 // pred_check
      _
    $region35: #{tpu_custom_call.1} parent=1 // pred_check_branch
      %217 = sbr.rel (0) target = $region37
    $region36: #{tpu_custom_call.1} parent=1 // pred_region
      %219 = vsyncadd [#allocation4], 0
      %s220 = sshll.u32 [#allocation8], 4
      %s221 = int_to_ptr.vmem [resolvable:$true] %s220
      %s222 = sshll.u32 %s5, 4
      %s223 = int_to_ptr.hbm [resolvable:$true] %s222
      %228 = dma.vmem_to_hbm [thread:$0]  %s221, 512, %s223, [#allocation4], 256, 256, 16
    $region37: #{tpu_custom_call.1} parent=1 // pred_fallthru
      _
    // Predicated region
    $region38: #{tpu_custom_call.1} parent=1 // pred_check
      _
    $region39: #{tpu_custom_call.1} parent=1 // pred_check_branch
      %230 = sbr.rel (0) target = $region41
    $region40: #{tpu_custom_call.1} parent=1 // pred_region
      %232 = dma.done [#allocation4], 512
    $region41: #{tpu_custom_call.1} parent=1 // pred_fallthru
      _
    %233 = vsyncpa [#allocation3], 1
    %234 = vsyncpa [#allocation6], 1
    %235 = vsyncpa [#allocation4], 1

</llo_original>
